<compile_context>
chip_gen: v7x
topology: tpu7x:2x2x1
jax: 0.10.0
libtpu: 0.0.40
codegen_flags: <defaults>
</compile_context>

<pallas_src>
import jax
import jax.numpy as jnp
from jax.experimental import pallas as pl
from jax.experimental.pallas import tpu as pltpu


_LANES = 128
_SMALL_BYTES = 256 * 1024  # below this, a fused XLA clip beats a kernel launch
_MiB = 1024 * 1024


def _chip_params():
    """(target_block_bytes, vmem_limit_bytes or None, num_tensorcores_per_chip)."""
    kind = ""
    try:
        kind = jax.devices()[0].device_kind.lower()
    except Exception:
        pass
    if "v7" in kind or "7x" in kind:
        # 3.2 TB/s HBM: 2 MiB blocks leave ~25% per-step overhead; use 8 MiB
        # blocks (peak 1 in + 1 out, double-buffered = 32 MiB) and raise the
        # scoped VMEM limit explicitly since 32 MiB is exactly the default.
        return 8 * _MiB, 48 * _MiB, 2
    if "v6" in kind:
        # Roofline plateau reached around 4 MiB tiles; peak 16 MiB << 32 MiB default.
        return 4 * _MiB, None, 1
    if "v5p" in kind:
        return 4 * _MiB, None, 1
    # v5e / unknown: default scoped VMEM is 16 MiB and HBM is slow enough that
    # the ~0.35 us per-step overhead is already <10% at 2 MiB blocks.
    return 2 * _MiB, None, 1


def _make_clamp_kernel(min_value, max_value):
    def kernel(x_ref, o_ref):
        x = x_ref[...]
        # Bounds cast to the input dtype (no weak-type promotion for int
        # inputs); they are trace-time constants folded into VPU min/max.
        lo = jnp.asarray(min_value, dtype=x.dtype)
        hi = jnp.asarray(max_value, dtype=x.dtype)
        # min-then-max ordering matches torch.Tensor.clamp; NaNs propagate.
        o_ref[...] = jnp.minimum(jnp.maximum(x, lo), hi)
    return kernel


def _pick_tile_rows(rows, lane_width, itemsize, target_block_bytes, num_cores):
    """Row-tile size: near the per-buffer byte target, sublane-aligned,
    preferring exact divisors of `rows` (full last block) and an even grid
    length on 2-TensorCore chips."""
    # Sub-32-bit dtypes pack along sublanes (8 f32, 16 bf16, 32 int8).
    sublane = max(8, 32 // itemsize)

    target = target_block_bytes // (lane_width * itemsize)
    target = max(sublane, (target // sublane) * sublane)
    if target >= rows:
        return rows  # single full-extent block (always a legal block shape)

    # Exact divisors of rows near the target: last block is full-sized
    # (unmasked vst, no cross-core imbalance from a short tail block).
    divisors = []
    d = 1
    while d * d <= rows:
        if rows % d == 0:
            divisors.append(d)
            if d != rows // d:
                divisors.append(rows // d)
        d += 1
    cands = [t for t in divisors if t % sublane == 0 and target // 2 <= t <= target]
    if num_cores >= 2:
        even = [t for t in cands if (rows // t) % 2 == 0]
        if even:
            return max(even)
    if cands:
        return max(cands)

    # No suitable divisor: use the plain target tile (partial last block gets a
    # masked store — correct, just slightly slower for that one block).  On
    # 2-TC chips, best-effort nudge to an even grid length for balanced work.
    tile = target
    if num_cores >= 2:
        nb = pl.cdiv(rows, tile)
        if nb > 1 and nb % 2 == 1:
            cand = -(-rows // (nb + 1))
            cand = -(-cand // sublane) * sublane
            if cand >= sublane and pl.cdiv(rows, cand) % 2 == 0:
                tile = cand
    return tile


def _clamp_2d(x2d, min_value, max_value, donate=False):
    """Clamp a lane-dense 2D slab (rows, L), L a multiple of 128."""
    rows, lane_width = x2d.shape
    dtype = x2d.dtype
    itemsize = jnp.dtype(dtype).itemsize

    target_bytes, vmem_limit, num_cores = _chip_params()
    tile_rows = _pick_tile_rows(rows, lane_width, itemsize, target_bytes, num_cores)
    num_blocks = pl.cdiv(rows, tile_rows)

    n = rows * lane_width
    cost = pl.CostEstimate(
        flops=2 * n, transcendentals=0, bytes_accessed=2 * n * itemsize)

    # TODO(synk): profile on v7x to confirm ("parallel",) shards the 1-D grid
    # across both TensorCores; if one core is idle, switch to CORE_PARALLEL.
    cp_kwargs = dict(dimension_semantics=("parallel",))
    if vmem_limit is not None:
        cp_kwargs["vmem_limit_bytes"] = vmem_limit

    call_kwargs = {}
    if donate:
        # Caller promises x may be overwritten: alias input 0 <-> output 0.
        call_kwargs["input_output_aliases"] = {0: 0}

    return pl.pallas_call(
        _make_clamp_kernel(min_value, max_value),
        out_shape=jax.ShapeDtypeStruct((rows, lane_width), dtype),
        grid=(num_blocks,),
        in_specs=[pl.BlockSpec((tile_rows, lane_width), lambda i: (i, 0))],
        out_specs=pl.BlockSpec((tile_rows, lane_width), lambda i: (i, 0)),
        compiler_params=pltpu.CompilerParams(**cp_kwargs),
        cost_estimate=cost,
        **call_kwargs,
    )(x2d)


def _jnp_clamp(x, min_value, max_value):
    lo = jnp.asarray(min_value, dtype=x.dtype)
    hi = jnp.asarray(max_value, dtype=x.dtype)
    return jnp.minimum(jnp.maximum(x, lo), hi)


def clamp_pallas(x, min_value, max_value, *, force_pallas=False, donate=False):
    """Elementwise clamp via a Pallas TPU kernel. Works for any input shape."""
    orig_shape = x.shape
    n = x.size
    if n == 0:
        return x
    itemsize = jnp.dtype(x.dtype).itemsize

    # Tiny tensors: kernel launch / pipeline overhead dominates; a fused XLA
    # elementwise clip is strictly cheaper.
    if not force_pallas and n * itemsize < _SMALL_BYTES:
        return _jnp_clamp(x, min_value, max_value)

    # Widest lane-dense width (large multiple of 128) dividing n exactly:
    # the reshape is free (no pad, no post-slice) and all stores are unmasked.
    lane_width = None
    for cand in (4096, 2048, 1024, 512, 256, 128):
        if n % cand == 0:
            lane_width = cand
            break

    if lane_width is None:
        # Ragged (n % 128 != 0): slice + kernel + concatenate would add 2-3x
        # HBM traffic; a single fused XLA clip is already at roofline.
        return _jnp_clamp(x, min_value, max_value)

    rows = n // lane_width
    out2d = _clamp_2d(x.reshape(rows, lane_width), min_value, max_value,
                      donate=donate)
    return out2d.reshape(orig_shape)


if __name__ == "__main__":
    key = jax.random.PRNGKey(0)
    min_value, max_value = -1.0, 1.0

    # Module-consistent NCHW input: B=2, C=4, H=W=16 (8 KiB -> small regime).
    x = jax.random.normal(key, (2, 4, 16, 16), dtype=jnp.float32) * 3.0
    ref = jnp.clip(x, min_value, max_value)

    # Force the Pallas kernel once at this shape to validate it end-to-end.
    y = jax.block_until_ready(clamp_pallas(x, min_value, max_value,
                                           force_pallas=True))
    assert y.shape == x.shape and y.dtype == x.dtype
    assert jnp.allclose(y, ref), "mismatch vs reference clamp (forced kernel)"

    # Default dispatch at this size takes the fused-clip fast path.
    y_fast = jax.block_until_ready(clamp_pallas(x, min_value, max_value))
    assert jnp.allclose(y_fast, ref), "mismatch vs reference clamp (fast path)"

    # Larger tensor (512 KiB) goes through the Pallas kernel by default.
    x_big = jax.random.normal(jax.random.PRNGKey(1), (2, 4, 128, 128),
                              dtype=jnp.float32) * 3.0
    y_big = jax.block_until_ready(clamp_pallas(x_big, min_value, max_value))
    assert jnp.allclose(y_big, jnp.clip(x_big, min_value, max_value))

    # Ragged shape (n % 128 != 0) -> single-pass jnp fallback.
    x_rag = jax.random.normal(jax.random.PRNGKey(2), (1, 1, 10, 13),
                              dtype=jnp.float32) * 3.0
    y_rag = jax.block_until_ready(clamp_pallas(x_rag, min_value, max_value))
    assert jnp.allclose(y_rag, jnp.clip(x_rag, min_value, max_value))

    print("KERNEL_OK")
</pallas_src>

<mosaic_0001>
module attributes {stable_mosaic.version = 11 : i64} {
  func.func @kernel(%arg0: i32, %arg1: memref<1x2048xf32, #tpu.memory_space<vmem>>, %arg2: memref<1x2048xf32, #tpu.memory_space<vmem>>) attributes {dimension_semantics = [#tpu.dimension_semantics<parallel>], iteration_bounds = array<i64: 1>, scalar_prefetch = 0 : i64, scratch_operands = 0 : i64, tpu.core_type = #tpu.core_type<tc>, window_params = [{transform_indices = @transform_0, window_bounds = array<i64: 1, 2048>}, {transform_indices = @transform_1, window_bounds = array<i64: 1, 2048>}]} {
    %c0 = arith.constant 0 : index
    %c0_0 = arith.constant 0 : index
    %0 = vector.load %arg1[%c0, %c0_0] : memref<1x2048xf32, #tpu.memory_space<vmem>>, vector<1x2048xf32>
    %cst = arith.constant -1.000000e+00 : f32
    %1 = vector.broadcast %cst : f32 to vector<1x2048xf32>
    %2 = arith.maximumf %0, %1 : vector<1x2048xf32>
    %cst_1 = arith.constant 1.000000e+00 : f32
    %3 = vector.broadcast %cst_1 : f32 to vector<1x2048xf32>
    %4 = arith.minimumf %2, %3 : vector<1x2048xf32>
    %c0_2 = arith.constant 0 : index
    %c0_3 = arith.constant 0 : index
    %5 = vector.load %arg2[%c0_2, %c0_3] : memref<1x2048xf32, #tpu.memory_space<vmem>>, vector<1x2048xf32>
    tpu.vector_store %arg2[%c0_2, %c0_3], %4 {strides = array<i32>} : memref<1x2048xf32, #tpu.memory_space<vmem>>, vector<1x2048xf32>,
    return
  }
  func.func @transform_0(%arg0: i32) -> (i32, i32) {
    %c0_i32 = arith.constant 0 : i32
    %c0_i32_0 = arith.constant 0 : i32
    return %arg0, %c0_i32 : i32, i32
  }
  func.func @transform_1(%arg0: i32) -> (i32, i32) {
    %c0_i32 = arith.constant 0 : i32
    %c0_i32_0 = arith.constant 0 : i32
    return %arg0, %c0_i32 : i32, i32
  }
}

</mosaic_0001>

<llo_original>
// kernel: tpu_custom_call.1
$region0: #{tpu_custom_call.1}
  #allocation0 [shape = 'u32[]', space=smem, size = 0x4, offset = 0x4, fixed_abs, tag = 'smem constant byte address 0x4 - core index']
  #allocation1 [shape = 'u32[144,128]{1,0:T(1,128)}', space=vmem, size = 0x12000, scoped, tag = 'internal scratch']
  %s0 = inlined_call_operand.hbm [shape: f32[1,2048], index: 0, kind: input, shape index: {}]
  %s1 = inlined_call_operand.hbm [shape: f32[1,2048], index: 1, kind: output, shape index: {}]
  %s2 = sld [smem:[#allocation0]]
  $region18: #{tpu_custom_call.1} parent=0
    _
  %s4 = ssub.s32 1, %s2
  %s5 = scalar_select 0, %s4, %s2
  $region1: #{tpu_custom_call.1} parent=0
    #allocation2 [shape = 'u8[8192]{0}', space=vmem, size = 0x2000, scoped, tag = 'input window, operand 0, single buffered']
    #allocation3 [shape = 's32[1]{0}', space=sflag, size = 0x4, scoped, tag = 'scoped memory for tpu_custom_call.1']
    #allocation4 [shape = 's32[1]{0}', space=sflag, size = 0x4, scoped, tag = 'scoped memory for tpu_custom_call.1']
    #allocation5 [shape = 'u8[8192]{0}', space=vmem, size = 0x2000, scoped, tag = 'output window, operand 0, single buffered']
    %6 = vsyncpa [#allocation3], 0
    %7 = vsyncpa [#allocation4], 0
    // Predicated region
    $region2: #{tpu_custom_call.1} parent=1 // pred_check
      _
    $region3: #{tpu_custom_call.1} parent=1 // pred_check_branch
      %9 = sbr.rel (0) target = $region5
    $region4: #{tpu_custom_call.1} parent=1 // pred_region
      %s11 = ssub.s32 256, 256
      %12 = vsyncadd [#allocation3], %s11
      %s14 = sshll.u32 [#allocation2], 4
      %s15 = int_to_ptr.vmem [resolvable:$true] %s14
      %17 = dma.hbm_to_vmem [thread:$0]  %s0, 256, %s15, [#allocation3]
    $region5: #{tpu_custom_call.1} parent=1 // pred_fallthru
      _
    // Predicated region
    $region6: #{tpu_custom_call.1} parent=1 // pred_check
      _
    $region7: #{tpu_custom_call.1} parent=1 // pred_check_branch
      %19 = sbr.rel (0) target = $region9
    $region8: #{tpu_custom_call.1} parent=1 // pred_region
      %20 = dma.done [#allocation3], 256
    $region9: #{tpu_custom_call.1} parent=1 // pred_fallthru
      _
    %v21 = vld [vmem:[#allocation2] sm:$0xff]
    %v22 = vld [vmem:[#allocation2 + $0x8] sm:$0xff]
    %v23 = vmax.f32 %v21, -1.0
    %v24 = vmax.f32 %v22, -1.0
    %v25 = vmin.f32 %v23, 1.0
    %v26 = vmin.f32 %v24, 1.0
    %27 = vst [vmem:[#allocation5] sm:$0xff] %v25
    %28 = vst [vmem:[#allocation5 + $0x8] sm:$0xff] %v26
    // Predicated region
    $region10: #{tpu_custom_call.1} parent=1 // pred_check
      _
    $region11: #{tpu_custom_call.1} parent=1 // pred_check_branch
      %30 = sbr.rel (0) target = $region13
    $region12: #{tpu_custom_call.1} parent=1 // pred_region
      %s32 = ssub.s32 256, 256
      %33 = vsyncadd [#allocation4], %s32
      %s35 = sshll.u32 [#allocation5], 4
      %s36 = int_to_ptr.vmem [resolvable:$true] %s35
      %38 = dma.vmem_to_hbm [thread:$0]  %s36, 256, %s1, [#allocation4]
    $region13: #{tpu_custom_call.1} parent=1 // pred_fallthru
      _
    // Predicated region
    $region14: #{tpu_custom_call.1} parent=1 // pred_check
      _
    $region15: #{tpu_custom_call.1} parent=1 // pred_check_branch
      %40 = sbr.rel (0) target = $region17
    $region16: #{tpu_custom_call.1} parent=1 // pred_region
      %41 = dma.done [#allocation4], 256
    $region17: #{tpu_custom_call.1} parent=1 // pred_fallthru
      _
    %42 = vsyncpa [#allocation3], 1
    %43 = vsyncpa [#allocation4], 1

</llo_original>
